<compile_context>
chip_gen: v7x
topology: tpu7x:2x2x1
jax: 0.10.0
libtpu: 0.0.40
codegen_flags: <defaults>
</compile_context>

<pallas_src>
import functools

import jax
import jax.numpy as jnp
from jax import lax
from jax.experimental import pallas as pl
from jax.experimental.pallas import tpu as pltpu  # noqa: F401  (kept for parity / future tiling)


# ----------------------------------------------------------------------------
# Fused Pallas kernel
# ----------------------------------------------------------------------------
def _adapter_kernel(*refs, scale, batch, add_residual, has_residual):
    # Ref order: inputs (x, [res], wd, bd, wu, bu, gamma, beta), then outputs (out, prompt).
    if has_residual:
        (x_ref, res_ref, wd_ref, bd_ref, wu_ref, bu_ref,
         gamma_ref, beta_ref, out_ref, prompt_ref) = refs
    else:
        (x_ref, wd_ref, bd_ref, wu_ref, bu_ref,
         gamma_ref, beta_ref, out_ref, prompt_ref) = refs
        res_ref = x_ref  # residual = x ; reuse the same VMEM tile (no duplicate DMA)

    # x/res: (B*N, C); wd: (Dn, C) PyTorch layout; wu: (C, Dn) PyTorch layout
    x = x_ref[...]

    # down = x @ Wd^T + bd   (transpose folded into the contraction dims -> MXU)
    down = lax.dot_general(x, wd_ref[...], (((1,), (1,)), ((), ())),
                           preferred_element_type=jnp.float32)
    down = down + bd_ref[...]

    # up = (down @ Wu^T + bu) * scale
    up = lax.dot_general(down, wu_ref[...], (((1,), (1,)), ((), ())),
                         preferred_element_type=jnp.float32)
    up = (up + bu_ref[...]) * scale

    # output = up (+ residual)
    if add_residual:
        if has_residual:
            out = up + res_ref[...]
        else:
            out = up + x  # x already live in vregs
    else:
        out = up
    out_ref[...] = out.astype(out_ref.dtype)

    # adapter_prompt = ReLU(up).mean(dim=0) -> (N, C), then TFTS: * gamma + beta
    rows, _ = up.shape
    n = rows // batch
    relu_up = jnp.maximum(up, 0.0)
    acc = relu_up[0:n, :]
    for b in range(1, batch):              # small static unroll; avoids 3-D reshape
        acc = acc + relu_up[b * n:(b + 1) * n, :]
    prompt = acc * (1.0 / batch)
    prompt_ref[...] = (prompt * gamma_ref[...] + beta_ref[...]).astype(prompt_ref.dtype)


# ----------------------------------------------------------------------------
# Wrapper
# ----------------------------------------------------------------------------
def adapter_generator(x, params, *, scale=0.1, add_residual=True, residual=None):
    """x: (B, N, C).  Returns (output (B, N, C), adapter_prompt (N, C))."""
    B, N, C = x.shape
    Dn = params["wd"].shape[0]
    has_residual = residual is not None

    x2 = x.reshape(B * N, C)
    inputs = [x2]
    if has_residual:
        inputs.append(residual.reshape(B * N, C))
    inputs += [
        params["wd"], params["bd"].reshape(1, Dn),
        params["wu"], params["bu"].reshape(1, C),
        params["gamma"].reshape(1, C), params["beta"].reshape(1, C),
    ]

    kernel = functools.partial(_adapter_kernel, scale=scale, batch=B,
                               add_residual=add_residual, has_residual=has_residual)
    out2, prompt = pl.pallas_call(
        kernel,
        out_shape=(jax.ShapeDtypeStruct((B * N, C), x.dtype),
                   jax.ShapeDtypeStruct((N, C), x.dtype)),
    )(*inputs)

    return out2.reshape(B, N, C), prompt
    # TODO(synk): adapter_layernorm_option='in'/'out' (LayerNorm branch) not implemented
    # — default config is 'none', which is the path translated here.


# ----------------------------------------------------------------------------
# Pure-JAX reference (sanity check)
# ----------------------------------------------------------------------------
def adapter_ref(x, params, *, scale=0.1, add_residual=True, residual=None):
    res = x if residual is None else residual
    down = x @ params["wd"].T + params["bd"]
    up = (down @ params["wu"].T + params["bu"]) * scale
    output = up + res if add_residual else up
    prompt = jnp.maximum(up, 0.0).mean(axis=0)
    prompt = prompt * params["gamma"] + params["beta"]
    return output, prompt


# ----------------------------------------------------------------------------
# Main
# ----------------------------------------------------------------------------
if __name__ == "__main__":
    B, N, C, Dn = 2, 8, 32, 16  # batch, seq, d_model, bottleneck
    key = jax.random.PRNGKey(0)
    ks = jax.random.split(key, 8)

    dtype = jnp.float32
    x = jax.random.normal(ks[0], (B, N, C), dtype=dtype)

    # Random (nonzero) params so the math is actually exercised.  The module's lora
    # init would zero up_proj, which would make the test trivially pass.
    init = 0.1
    params = {
        "wd": jax.random.uniform(ks[1], (Dn, C), dtype, -init, init),   # down_proj.weight
        "bd": jax.random.uniform(ks[2], (Dn,), dtype, -init, init),     # down_proj.bias
        "wu": jax.random.uniform(ks[3], (C, Dn), dtype, -init, init),   # up_proj.weight
        "bu": jax.random.uniform(ks[4], (C,), dtype, -init, init),      # up_proj.bias
        "gamma": 1.0 + 0.02 * jax.random.normal(ks[5], (C,), dtype),    # tfts_gamma
        "beta": 0.02 * jax.random.normal(ks[6], (C,), dtype),           # tfts_beta
    }

    # Path 1: residual = x (default), add_residual=True  (kernel reuses x for residual)
    out, prompt = adapter_generator(x, params, scale=0.1, add_residual=True)
    out = jax.block_until_ready(out)
    prompt = jax.block_until_ready(prompt)

    ref_out, ref_prompt = adapter_ref(x, params, scale=0.1, add_residual=True)
    assert out.shape == (B, N, C)
    assert prompt.shape == (N, C)
    assert jnp.allclose(out, ref_out, atol=1e-5, rtol=1e-5), "output mismatch vs reference"
    assert jnp.allclose(prompt, ref_prompt, atol=1e-5, rtol=1e-5), "prompt mismatch vs reference"

    # Path 2: explicit residual (separate residual input variant of the kernel)
    res = jax.random.normal(ks[7], (B, N, C), dtype=dtype)
    out2, prompt2 = adapter_generator(x, params, scale=0.1, add_residual=True, residual=res)
    out2 = jax.block_until_ready(out2)
    prompt2 = jax.block_until_ready(prompt2)
    ref_out2, ref_prompt2 = adapter_ref(x, params, scale=0.1, add_residual=True, residual=res)
    assert jnp.allclose(out2, ref_out2, atol=1e-5, rtol=1e-5), "output mismatch (explicit residual)"
    assert jnp.allclose(prompt2, ref_prompt2, atol=1e-5, rtol=1e-5), "prompt mismatch (explicit residual)"

    print("KERNEL_OK")
</pallas_src>

<mosaic_0001>
module attributes {stable_mosaic.version = 11 : i64} {
  func.func @_adapter_kernel(%arg0: memref<16x32xf32, #tpu.memory_space<vmem>>, %arg1: memref<16x32xf32, #tpu.memory_space<vmem>>, %arg2: memref<1x16xf32, #tpu.memory_space<vmem>>, %arg3: memref<32x16xf32, #tpu.memory_space<vmem>>, %arg4: memref<1x32xf32, #tpu.memory_space<vmem>>, %arg5: memref<1x32xf32, #tpu.memory_space<vmem>>, %arg6: memref<1x32xf32, #tpu.memory_space<vmem>>, %arg7: memref<16x32xf32, #tpu.memory_space<vmem>>, %arg8: memref<8x32xf32, #tpu.memory_space<vmem>>) attributes {dimension_semantics = [], scalar_prefetch = 0 : i64, scratch_operands = 0 : i64, tpu.core_type = #tpu.core_type<tc>} {
    %c0 = arith.constant 0 : index
    %c0_0 = arith.constant 0 : index
    %0 = vector.load %arg0[%c0, %c0_0] : memref<16x32xf32, #tpu.memory_space<vmem>>, vector<16x32xf32>
    %c0_1 = arith.constant 0 : index
    %c0_2 = arith.constant 0 : index
    %1 = vector.load %arg1[%c0_1, %c0_2] : memref<16x32xf32, #tpu.memory_space<vmem>>, vector<16x32xf32>
    %cst = arith.constant dense<0.000000e+00> : vector<16x16xf32>
    %2 = tpu.matmul %0, %1, %cst {dimension_numbers = #tpu.dot_dimension_numbers<[1], [1], [0], [0], [0, 0, 1, 0], [], []>} : vector<16x32xf32>, vector<16x32xf32>, vector<16x16xf32> -> vector<16x16xf32>
    %c0_3 = arith.constant 0 : index
    %c0_4 = arith.constant 0 : index
    %3 = vector.load %arg2[%c0_3, %c0_4] : memref<1x16xf32, #tpu.memory_space<vmem>>, vector<1x16xf32>
    %4 = vector.broadcast %3 : vector<1x16xf32> to vector<16x16xf32>
    %5 = arith.addf %2, %4 : vector<16x16xf32>
    %c0_5 = arith.constant 0 : index
    %c0_6 = arith.constant 0 : index
    %6 = vector.load %arg3[%c0_5, %c0_6] : memref<32x16xf32, #tpu.memory_space<vmem>>, vector<32x16xf32>
    %cst_7 = arith.constant dense<0.000000e+00> : vector<16x32xf32>
    %7 = tpu.matmul %5, %6, %cst_7 {dimension_numbers = #tpu.dot_dimension_numbers<[1], [1], [0], [0], [0, 0, 1, 0], [], []>} : vector<16x16xf32>, vector<32x16xf32>, vector<16x32xf32> -> vector<16x32xf32>
    %c0_8 = arith.constant 0 : index
    %c0_9 = arith.constant 0 : index
    %8 = vector.load %arg4[%c0_8, %c0_9] : memref<1x32xf32, #tpu.memory_space<vmem>>, vector<1x32xf32>
    %9 = vector.broadcast %8 : vector<1x32xf32> to vector<16x32xf32>
    %10 = arith.addf %7, %9 : vector<16x32xf32>
    %cst_10 = arith.constant 1.000000e-01 : f32
    %11 = vector.broadcast %cst_10 : f32 to vector<16x32xf32>
    %12 = arith.mulf %10, %11 : vector<16x32xf32>
    %13 = arith.addf %12, %0 : vector<16x32xf32>
    %c0_11 = arith.constant 0 : index
    %c0_12 = arith.constant 0 : index
    %14 = vector.load %arg7[%c0_11, %c0_12] : memref<16x32xf32, #tpu.memory_space<vmem>>, vector<16x32xf32>
    tpu.vector_store %arg7[%c0_11, %c0_12], %13 {strides = array<i32>} : memref<16x32xf32, #tpu.memory_space<vmem>>, vector<16x32xf32>,
    %cst_13 = arith.constant 0.000000e+00 : f32
    %15 = vector.broadcast %cst_13 : f32 to vector<16x32xf32>
    %16 = arith.maximumf %12, %15 : vector<16x32xf32>
    %17 = vector.extract_strided_slice %16 {offsets = [0, 0], sizes = [8, 32], strides = [1, 1]} : vector<16x32xf32> to vector<8x32xf32>
    %18 = vector.extract_strided_slice %16 {offsets = [8, 0], sizes = [8, 32], strides = [1, 1]} : vector<16x32xf32> to vector<8x32xf32>
    %19 = arith.addf %17, %18 : vector<8x32xf32>
    %cst_14 = arith.constant 5.000000e-01 : f32
    %20 = vector.broadcast %cst_14 : f32 to vector<8x32xf32>
    %21 = arith.mulf %19, %20 : vector<8x32xf32>
    %c0_15 = arith.constant 0 : index
    %c0_16 = arith.constant 0 : index
    %22 = vector.load %arg5[%c0_15, %c0_16] : memref<1x32xf32, #tpu.memory_space<vmem>>, vector<1x32xf32>
    %23 = vector.broadcast %22 : vector<1x32xf32> to vector<8x32xf32>
    %24 = arith.mulf %21, %23 : vector<8x32xf32>
    %c0_17 = arith.constant 0 : index
    %c0_18 = arith.constant 0 : index
    %25 = vector.load %arg6[%c0_17, %c0_18] : memref<1x32xf32, #tpu.memory_space<vmem>>, vector<1x32xf32>
    %26 = vector.broadcast %25 : vector<1x32xf32> to vector<8x32xf32>
    %27 = arith.addf %24, %26 : vector<8x32xf32>
    %c0_19 = arith.constant 0 : index
    %c0_20 = arith.constant 0 : index
    %28 = vector.load %arg8[%c0_19, %c0_20] : memref<8x32xf32, #tpu.memory_space<vmem>>, vector<8x32xf32>
    tpu.vector_store %arg8[%c0_19, %c0_20], %27 {strides = array<i32>} : memref<8x32xf32, #tpu.memory_space<vmem>>, vector<8x32xf32>,
    return
  }
}

</mosaic_0001>

<llo_original>
// kernel: tpu_custom_call.1
$region0: #{tpu_custom_call.1}
  #allocation0 [shape = 'u32[]', space=smem, size = 0x4, offset = 0x4, fixed_abs, tag = 'smem constant byte address 0x4 - core index']
  #allocation1 [shape = 'u32[144,128]{1,0:T(1,128)}', space=vmem, size = 0x12000, scoped, tag = 'internal scratch']
  %s0 = inlined_call_operand.vmem [shape: f32[16,32], index: 0, kind: input, shape index: {}]
  %s1 = inlined_call_operand.vmem [shape: f32[16,32], index: 1, kind: input, shape index: {}]
  %s2 = inlined_call_operand.vmem [shape: f32[1,16], index: 2, kind: input, shape index: {}]
  %s3 = inlined_call_operand.vmem [shape: f32[32,16], index: 3, kind: input, shape index: {}]
  %s4 = inlined_call_operand.vmem [shape: f32[1,32], index: 4, kind: input, shape index: {}]
  %s5 = inlined_call_operand.vmem [shape: f32[1,32], index: 5, kind: input, shape index: {}]
  %s6 = inlined_call_operand.vmem [shape: f32[1,32], index: 6, kind: input, shape index: {}]
  %s7 = inlined_call_operand.hbm [shape: f32[16,32], index: 7, kind: output, shape index: {0}]
  %s8 = inlined_call_operand.hbm [shape: f32[8,32], index: 8, kind: output, shape index: {1}]
  %9 = xla_tuple %s7, %s8
  %s10 = sld [smem:[#allocation0]]
  $region46: #{tpu_custom_call.1} parent=0
    _
  %s12 = ssub.s32 1, %s10
  %s13 = scalar_select 0, %s12, %s10
  $region1: #{tpu_custom_call.1} parent=0
    #allocation2 [shape = 'u8[8192]{0}', space=vmem, size = 0x2000, scoped, tag = 'output window, operand 0, single buffered']
    #allocation3 [shape = 's32[1]{0}', space=sflag, size = 0x4, scoped, tag = 'scoped memory for tpu_custom_call.1']
    #allocation4 [shape = 'u8[4096]{0}', space=vmem, size = 0x1000, scoped, tag = 'output window, operand 1, single buffered']
    #allocation5 [shape = 's32[1]{0}', space=sflag, size = 0x4, scoped, tag = 'scoped memory for tpu_custom_call.1']
    %14 = vsyncpa [#allocation3], 0
    %15 = vsyncpa [#allocation5], 0
    // Predicated region
    $region2: #{tpu_custom_call.1} parent=1 // pred_check
      _
    $region3: #{tpu_custom_call.1} parent=1 // pred_check_branch
      %17 = sbr.rel (0) target = $region5
    $region4: #{tpu_custom_call.1} parent=1 // pred_region
      _
    $region5: #{tpu_custom_call.1} parent=1 // pred_fallthru
      _
    // Predicated region
    $region6: #{tpu_custom_call.1} parent=1 // pred_check
      _
    $region7: #{tpu_custom_call.1} parent=1 // pred_check_branch
      %19 = sbr.rel (0) target = $region9
    $region8: #{tpu_custom_call.1} parent=1 // pred_region
      _
    $region9: #{tpu_custom_call.1} parent=1 // pred_fallthru
      _
    // Predicated region
    $region10: #{tpu_custom_call.1} parent=1 // pred_check
      _
    $region11: #{tpu_custom_call.1} parent=1 // pred_check_branch
      %21 = sbr.rel (0) target = $region13
    $region12: #{tpu_custom_call.1} parent=1 // pred_region
      _
    $region13: #{tpu_custom_call.1} parent=1 // pred_fallthru
      _
    // Predicated region
    $region14: #{tpu_custom_call.1} parent=1 // pred_check
      _
    $region15: #{tpu_custom_call.1} parent=1 // pred_check_branch
      %23 = sbr.rel (0) target = $region17
    $region16: #{tpu_custom_call.1} parent=1 // pred_region
      _
    $region17: #{tpu_custom_call.1} parent=1 // pred_fallthru
      _
    // Predicated region
    $region18: #{tpu_custom_call.1} parent=1 // pred_check
      _
    $region19: #{tpu_custom_call.1} parent=1 // pred_check_branch
      %25 = sbr.rel (0) target = $region21
    $region20: #{tpu_custom_call.1} parent=1 // pred_region
      _
    $region21: #{tpu_custom_call.1} parent=1 // pred_fallthru
      _
    // Predicated region
    $region22: #{tpu_custom_call.1} parent=1 // pred_check
      _
    $region23: #{tpu_custom_call.1} parent=1 // pred_check_branch
      %27 = sbr.rel (0) target = $region25
    $region24: #{tpu_custom_call.1} parent=1 // pred_region
      _
    $region25: #{tpu_custom_call.1} parent=1 // pred_fallthru
      _
    // Predicated region
    $region26: #{tpu_custom_call.1} parent=1 // pred_check
      _
    $region27: #{tpu_custom_call.1} parent=1 // pred_check_branch
      %29 = sbr.rel (0) target = $region29
    $region28: #{tpu_custom_call.1} parent=1 // pred_region
      _
    $region29: #{tpu_custom_call.1} parent=1 // pred_fallthru
      _
    %v30 = vld [vmem:[%s0] sm:$0xff]
    %v31 = vld [vmem:[%s0 + $0x8] sm:$0xff]
    %v32 = vld [vmem:[%s1] sm:$0xff]
    %v33 = vld [vmem:[%s1 + $0x8] sm:$0xff]
    %v34 = vld [vmem:[%s2] sm:$0x1]
    %v36 = vlaneseq
    %v37 = vshrl.u32 %v36, 7
    %v38 = vsub.s32 0, %v37
    %v39 = vrot.slane %v34, %v38
    %vm41 = vcmask 261120
    %v43 = vsel %vm41, %v30, 0
    %v46 = vsel %vm41, %v31, 0
    %v49 = vsel %vm41, %v32, 0
    %v52 = vsel %vm41, %v33, 0
    %54 = vmatprep.subr.mxu0 0.0
    %55 = vmatpush1.xpose.msra.mxu0 %v49
    %56 = vmatprep.subr.mxu0 0.0
    %57 = vmatpush1.xpose.msra.mxu0 %v52
    %58 = vmatprep.subr.mxu0 0.0
    %59 = vmatpush1.xpose.msra.mxu0 0.0
    %60 = vmatprep.subr.mxu0 0.0
    %61 = vmatpush1.xpose.msra.mxu0 0.0
    %62 = vmatprep.subr.mxu0 0.0
    %63 = vmatpush1.xpose.msra.mxu0 0.0
    %64 = vmatprep.subr.mxu0 0.0
    %65 = vmatpush1.xpose.msra.mxu0 0.0
    %66 = vmatprep.subr.mxu0 0.0
    %67 = vmatpush1.xpose.msra.mxu0 0.0
    %68 = vmatprep.subr.mxu0 0.0
    %69 = vmatpush1.xpose.msra.mxu0 0.0
    %70 = vmatprep.subr.mxu0 0.0
    %71 = vmatpush1.xpose.msra.mxu0 0.0
    %72 = vmatprep.subr.mxu0 0.0
    %73 = vmatpush1.xpose.msra.mxu0 0.0
    %74 = vmatprep.subr.mxu0 0.0
    %75 = vmatpush1.xpose.msra.mxu0 0.0
    %76 = vmatprep.subr.mxu0 0.0
    %77 = vmatpush1.xpose.msra.mxu0 0.0
    %78 = vmatprep.subr.mxu0 0.0
    %79 = vmatpush1.xpose.msra.mxu0 0.0
    %80 = vmatprep.subr.mxu0 0.0
    %81 = vmatpush1.xpose.msra.mxu0 0.0
    %82 = vmatprep.subr.mxu0 0.0
    %83 = vmatpush1.xpose.msra.mxu0 0.0
    %84 = vmatprep.subr.mxu0 0.0
    %85 = vmatpush1.xpose.msra.mxu0 0.0
    %86 = vmatprep.subr.mxu0 0.0
    %87 = vmatpush1.xpose.msra.mxu0 0.0
    %88 = vmatprep.subr.mxu0 0.0
    %89 = vmatpush1.xpose.msra.mxu0 0.0
    %90 = vmatprep.subr.mxu0 0.0
    %91 = vmatpush1.xpose.msra.mxu0 0.0
    %92 = vmatprep.subr.mxu0 0.0
    %93 = vmatpush1.xpose.msra.mxu0 0.0
    %94 = vmatprep.subr.mxu0 0.0
    %95 = vmatpush1.xpose.msra.mxu0 0.0
    %96 = vmatprep.subr.mxu0 0.0
    %97 = vmatpush1.xpose.msra.mxu0 0.0
    %98 = vmatprep.subr.mxu0 0.0
    %99 = vmatpush1.xpose.msra.mxu0 0.0
    %100 = vmatprep.subr.mxu0 0.0
    %101 = vmatpush1.xpose.msra.mxu0 0.0
    %102 = vmatprep.subr.mxu0 0.0
    %103 = vmatpush1.xpose.msra.mxu0 0.0
    %104 = vmatprep.subr.mxu0 0.0
    %105 = vmatpush1.xpose.msra.mxu0 0.0
    %106 = vmatprep.subr.mxu0 0.0
    %107 = vmatpush1.xpose.msra.mxu0 0.0
    %108 = vmatprep.subr.mxu0 0.0
    %109 = vmatpush1.xpose.msra.mxu0 0.0
    %110 = vmatprep.subr.mxu0 0.0
    %111 = vmatpush1.xpose.msra.mxu0 0.0
    %112 = vmatprep.subr.mxu0 0.0
    %113 = vmatpush1.xpose.msra.mxu0 0.0
    %114 = vmatprep.subr.mxu0 0.0
    %115 = vmatpush1.xpose.msra.mxu0 0.0
    %116 = vmatprep.subr.mxu0 0.0
    %117 = vmatpush1.xpose.msra.mxu0 0.0
    %118 = vmatprep.mubr.f32.mxu0 0.0
    %119 = vmatmul.mubr.f32.gmra.mrb[0].mxu0 %v43
    %v120 = vpop.f32.mrb[0].mxu0
    %v121 = vadd.f32 %v39, %v120
    %v122 = vpop.f32.mrb[0].mxu0
    %123 = vmatprep.mubr.f32.mxu0 0.0
    %124 = vmatmul.mubr.f32.gmra.mrb[0].mxu0 %v46
    %v125 = vpop.f32.mrb[0].mxu0
    %v126 = vadd.f32 %v39, %v125
    %v127 = vpop.f32.mrb[0].mxu0
    %128 = vdwg.mxu0
    %v129 = vld [vmem:[%s3] sm:$0xff]
    %v130 = vld [vmem:[%s3 + $0x8] sm:$0xff]
    %v131 = vld [vmem:[%s3 + $0x10] sm:$0xff]
    %v132 = vld [vmem:[%s3 + $0x18] sm:$0xff]
    %v133 = vld [vmem:[%s4] sm:$0x1]
    %v135 = vlaneseq
    %v136 = vshrl.u32 %v135, 7
    %v137 = vsub.s32 0, %v136
    %v138 = vrot.slane %v133, %v137
    %vm140 = vcmask 130048
    %v142 = vsel %vm140, %v121, 0
    %v145 = vsel %vm140, %v126, 0
    %v148 = vsel %vm140, %v129, 0
    %v151 = vsel %vm140, %v130, 0
    %v154 = vsel %vm140, %v131, 0
    %v157 = vsel %vm140, %v132, 0
    %159 = vmatprep.subr.mxu0 0.0
    %160 = vmatpush1.xpose.msra.mxu0 %v148
    %161 = vmatprep.subr.mxu0 0.0
    %162 = vmatpush1.xpose.msra.mxu0 %v151
    %163 = vmatprep.subr.mxu0 0.0
    %164 = vmatpush1.xpose.msra.mxu0 %v154
    %165 = vmatprep.subr.mxu0 0.0
    %166 = vmatpush1.xpose.msra.mxu0 %v157
    %167 = vmatprep.subr.mxu0 0.0
    %168 = vmatpush1.xpose.msra.mxu0 0.0
    %169 = vmatprep.subr.mxu0 0.0
    %170 = vmatpush1.xpose.msra.mxu0 0.0
    %171 = vmatprep.subr.mxu0 0.0
    %172 = vmatpush1.xpose.msra.mxu0 0.0
    %173 = vmatprep.subr.mxu0 0.0
    %174 = vmatpush1.xpose.msra.mxu0 0.0
    %175 = vmatprep.subr.mxu0 0.0
    %176 = vmatpush1.xpose.msra.mxu0 0.0
    %177 = vmatprep.subr.mxu0 0.0
    %178 = vmatpush1.xpose.msra.mxu0 0.0
    %179 = vmatprep.subr.mxu0 0.0
    %180 = vmatpush1.xpose.msra.mxu0 0.0
    %181 = vmatprep.subr.mxu0 0.0
    %182 = vmatpush1.xpose.msra.mxu0 0.0
    %183 = vmatprep.subr.mxu0 0.0
    %184 = vmatpush1.xpose.msra.mxu0 0.0
    %185 = vmatprep.subr.mxu0 0.0
    %186 = vmatpush1.xpose.msra.mxu0 0.0
    %187 = vmatprep.subr.mxu0 0.0
    %188 = vmatpush1.xpose.msra.mxu0 0.0
    %189 = vmatprep.subr.mxu0 0.0
    %190 = vmatpush1.xpose.msra.mxu0 0.0
    %191 = vmatprep.subr.mxu0 0.0
    %192 = vmatpush1.xpose.msra.mxu0 0.0
    %193 = vmatprep.subr.mxu0 0.0
    %194 = vmatpush1.xpose.msra.mxu0 0.0
    %195 = vmatprep.subr.mxu0 0.0
    %196 = vmatpush1.xpose.msra.mxu0 0.0
    %197 = vmatprep.subr.mxu0 0.0
    %198 = vmatpush1.xpose.msra.mxu0 0.0
    %199 = vmatprep.subr.mxu0 0.0
    %200 = vmatpush1.xpose.msra.mxu0 0.0
    %201 = vmatprep.subr.mxu0 0.0
    %202 = vmatpush1.xpose.msra.mxu0 0.0
    %203 = vmatprep.subr.mxu0 0.0
    %204 = vmatpush1.xpose.msra.mxu0 0.0
    %205 = vmatprep.subr.mxu0 0.0
    %206 = vmatpush1.xpose.msra.mxu0 0.0
    %207 = vmatprep.subr.mxu0 0.0
    %208 = vmatpush1.xpose.msra.mxu0 0.0
    %209 = vmatprep.subr.mxu0 0.0
    %210 = vmatpush1.xpose.msra.mxu0 0.0
    %211 = vmatprep.subr.mxu0 0.0
    %212 = vmatpush1.xpose.msra.mxu0 0.0
    %213 = vmatprep.subr.mxu0 0.0
    %214 = vmatpush1.xpose.msra.mxu0 0.0
    %215 = vmatprep.subr.mxu0 0.0
    %216 = vmatpush1.xpose.msra.mxu0 0.0
    %217 = vmatprep.subr.mxu0 0.0
    %218 = vmatpush1.xpose.msra.mxu0 0.0
    %219 = vmatprep.subr.mxu0 0.0
    %220 = vmatpush1.xpose.msra.mxu0 0.0
    %221 = vmatprep.subr.mxu0 0.0
    %222 = vmatpush1.xpose.msra.mxu0 0.0
    %223 = vmatprep.mubr.f32.mxu0 0.0
    %224 = vmatmul.mubr.f32.gmra.mrb[0].mxu0 %v142
    %v225 = vpop.f32.mrb[0].mxu0
    %v226 = vadd.f32 %v138, %v225
    %v227 = vpop.f32.mrb[0].mxu0
    %228 = vmatprep.mubr.f32.mxu0 0.0
    %229 = vmatmul.mubr.f32.gmra.mrb[0].mxu0 %v145
    %v230 = vpop.f32.mrb[0].mxu0
    %v231 = vadd.f32 %v138, %v230
    %v232 = vpop.f32.mrb[0].mxu0
    %233 = vdwg.mxu0
    %v234 = vmul.f32 %v226, 0.1
    %v235 = vmul.f32 %v231, 0.1
    %v236 = vadd.f32 %v234, %v30
    %v237 = vadd.f32 %v235, %v31
    %238 = vst.msk [vmem:[#allocation2] sm:$0xff] %vm41, %v236
    %239 = vst.msk [vmem:[#allocation2 + $0x8] sm:$0xff] %vm41, %v237
    %v240 = vmax.f32 %v234, 0.0
    %v241 = vmax.f32 %v235, 0.0
    %v242 = vadd.f32 %v240, %v241
    %v243 = vmul.f32 %v242, 0.5
    %v244 = vld [vmem:[%s5] sm:$0x1]
    %v246 = vlaneseq
    %v247 = vshrl.u32 %v246, 7
    %v248 = vsub.s32 0, %v247
    %v249 = vrot.slane %v244, %v248
    %v251 = vmul.f32 %v243, %v249
    %v252 = vld [vmem:[%s6] sm:$0x1]
    %v254 = vlaneseq
    %v255 = vshrl.u32 %v254, 7
    %v256 = vsub.s32 0, %v255
    %v257 = vrot.slane %v252, %v256
    %v259 = vadd.f32 %v251, %v257
    %260 = vst.msk [vmem:[#allocation4] sm:$0xff] %vm41, %v259
    // Predicated region
    $region30: #{tpu_custom_call.1} parent=1 // pred_check
      _
    $region31: #{tpu_custom_call.1} parent=1 // pred_check_branch
      %262 = sbr.rel (0) target = $region33
    $region32: #{tpu_custom_call.1} parent=1 // pred_region
      %s264 = ssub.s32 256, 256
      %265 = vsyncadd [#allocation3], %s264
      %s266 = sshll.u32 [#allocation2], 4
      %s267 = int_to_ptr.vmem [resolvable:$true] %s266
      %272 = dma.vmem_to_hbm [thread:$0]  %s267, 256, %s7, [#allocation3], 128, 128, 8
    $region33: #{tpu_custom_call.1} parent=1 // pred_fallthru
      _
    // Predicated region
    $region34: #{tpu_custom_call.1} parent=1 // pred_check
      _
    $region35: #{tpu_custom_call.1} parent=1 // pred_check_branch
      %274 = sbr.rel (0) target = $region37
    $region36: #{tpu_custom_call.1} parent=1 // pred_region
      %s276 = ssub.s32 128, 128
      %277 = vsyncadd [#allocation5], %s276
      %s279 = sshll.u32 [#allocation4], 4
      %s280 = int_to_ptr.vmem [resolvable:$true] %s279
      %282 = dma.vmem_to_hbm [thread:$0]  %s280, 128, %s8, [#allocation5]
    $region37: #{tpu_custom_call.1} parent=1 // pred_fallthru
      _
    // Predicated region
    $region38: #{tpu_custom_call.1} parent=1 // pred_check
      _
    $region39: #{tpu_custom_call.1} parent=1 // pred_check_branch
      %284 = sbr.rel (0) target = $region41
    $region40: #{tpu_custom_call.1} parent=1 // pred_region
      %285 = dma.done [#allocation3], 256
    $region41: #{tpu_custom_call.1} parent=1 // pred_fallthru
      _
    // Predicated region
    $region42: #{tpu_custom_call.1} parent=1 // pred_check
      _
    $region43: #{tpu_custom_call.1} parent=1 // pred_check_branch
      %287 = sbr.rel (0) target = $region45
    $region44: #{tpu_custom_call.1} parent=1 // pred_region
      %288 = dma.done [#allocation5], 128
    $region45: #{tpu_custom_call.1} parent=1 // pred_fallthru
      _
    %289 = vsyncpa [#allocation3], 1
    %290 = vsyncpa [#allocation5], 1

</llo_original>
